<compile_context>
chip_gen: v6e
topology: v6e:2x2x1
jax: 0.10.0
libtpu: 0.0.40
codegen_flags: <defaults>
</compile_context>

<pallas_src>
import jax
import jax.numpy as jnp
from jax.experimental import pallas as pl
from jax.experimental.pallas import tpu as pltpu


def _dsconv_kernel(wf_ref, p_ref, o_ref):
    # wf_ref: (Cout, K*K*Cin)     bf16  fused depthwise*pointwise weights
    # p_ref : (K*K*Cin, N*Ho*Wo)  bf16  im2col activation patches (lane-dense)
    # o_ref : (Cout, N*Ho*Wo)     f32   lane-dense output (512 lanes -> full vst)
    o_ref[...] = jnp.dot(
        wf_ref[...], p_ref[...], preferred_element_type=jnp.float32
    ).astype(o_ref.dtype)


def depthwise_separable_conv(x_nchw, dw_weight, pw_weight, *, stride=1, padding=0):
    """Forward pass matching PyTorch DepthwiseSeparableConv (bias=False).

    x_nchw   : (N, Cin, H, W)
    dw_weight: (Cin, 1, K, K)    -- nn.Conv2d(groups=Cin) weight layout
    pw_weight: (Cout, Cin, 1, 1)
    returns  : (N, Cout, Ho, Wo)
    """
    N, Cin, H, W = x_nchw.shape
    K = dw_weight.shape[-1]
    Cout = pw_weight.shape[0]
    Ho = (H + 2 * padding - K) // stride + 1
    Wo = (W + 2 * padding - K) // stride + 1
    KKC = K * K * Cin
    NHW = N * Ho * Wo

    # --- Weight fusion (f32), then single 2D bf16 tile matching im2col order ---
    dw2 = dw_weight[:, 0, :, :].astype(jnp.float32)          # (Cin, K, K)
    pw2 = pw_weight[:, :, 0, 0].astype(jnp.float32)          # (Cout, Cin)
    wf = jnp.einsum('oc,ckl->oklc', pw2, dw2)                # (Cout, K, K, Cin)
    wf2d = wf.reshape(Cout, KKC).astype(jnp.bfloat16)        # (Cout, K*K*Cin)

    # --- im2col in the wrapper: lane-dense (K*K*Cin, N*Ho*Wo) activation ---
    x_nhwc = jnp.transpose(x_nchw, (0, 2, 3, 1))
    x_pad = jnp.pad(x_nhwc, ((0, 0), (padding, padding), (padding, padding), (0, 0)))
    cols = []
    for kh in range(K):
        for kw in range(K):
            cols.append(x_pad[:,
                              kh:kh + (Ho - 1) * stride + 1:stride,
                              kw:kw + (Wo - 1) * stride + 1:stride,
                              :])                            # (N, Ho, Wo, Cin)
    patches = jnp.stack(cols, axis=0)                        # (K*K, N, Ho, Wo, Cin)
    patches = jnp.transpose(patches, (0, 4, 1, 2, 3))        # (K*K, Cin, N, Ho, Wo)
    patches = patches.reshape(KKC, NHW).astype(jnp.bfloat16)

    # --- Single-step Pallas GEMM: (Cout, KKC) x (KKC, NHW) -> (Cout, NHW) ---
    out2d = pl.pallas_call(
        _dsconv_kernel,
        out_shape=jax.ShapeDtypeStruct((Cout, NHW), jnp.float32),
        grid_spec=pltpu.PrefetchScalarGridSpec(
            num_scalar_prefetch=0,
            grid=(1,),
            in_specs=[
                pl.BlockSpec((Cout, KKC), lambda i: (0, 0)),
                pl.BlockSpec((KKC, NHW), lambda i: (0, 0)),
            ],
            out_specs=pl.BlockSpec((Cout, NHW), lambda i: (0, 0)),
        ),
        compiler_params=pltpu.CompilerParams(
            dimension_semantics=("arbitrary",)),
    )(wf2d, patches)

    # (Cout, N*Ho*Wo) -> (N, Cout, Ho, Wo); tiny output, cheap wrapper transpose.
    out = out2d.reshape(Cout, N, Ho, Wo).transpose(1, 0, 2, 3)
    return out.astype(x_nchw.dtype)


def _reference(x_nchw, dw_weight, pw_weight, *, stride, padding):
    # Plain-JAX reference using lax conv (NCHW, OIHW) for correctness check.
    Cin = x_nchw.shape[1]
    dw_out = jax.lax.conv_general_dilated(
        x_nchw, dw_weight,
        window_strides=(stride, stride),
        padding=[(padding, padding), (padding, padding)],
        dimension_numbers=("NCHW", "OIHW", "NCHW"),
        feature_group_count=Cin)
    return jax.lax.conv_general_dilated(
        dw_out, pw_weight,
        window_strides=(1, 1), padding="VALID",
        dimension_numbers=("NCHW", "OIHW", "NCHW"))


if __name__ == "__main__":
    # Module config: in_channels=4, out_channels=8, kernel_size=3, stride=1, padding=1, bias=False
    N, Cin, H, W = 2, 4, 16, 16
    Cout, K, stride, padding = 8, 3, 1, 1

    key = jax.random.PRNGKey(0)
    kx, kdw, kpw = jax.random.split(key, 3)
    x = jax.random.normal(kx, (N, Cin, H, W), dtype=jnp.float32)
    dw_weight = jax.random.normal(kdw, (Cin, 1, K, K), dtype=jnp.float32) * 0.1
    pw_weight = jax.random.normal(kpw, (Cout, Cin, 1, 1), dtype=jnp.float32) * 0.1

    out = depthwise_separable_conv(x, dw_weight, pw_weight, stride=stride, padding=padding)
    out = jax.block_until_ready(out)

    ref = _reference(x, dw_weight, pw_weight, stride=stride, padding=padding)
    assert out.shape == (N, Cout, H, W), out.shape
    # bf16 MXU inputs with f32 accumulation -> loosened tolerance vs f32 reference.
    assert jnp.allclose(out, ref, atol=2e-2, rtol=2e-2), float(jnp.max(jnp.abs(out - ref)))
    print("KERNEL_OK")
</pallas_src>

<mosaic_0001>
module attributes {stable_mosaic.version = 11 : i64} {
  func.func @_dsconv_kernel(%arg0: i32, %arg1: memref<8x36xbf16, #tpu.memory_space<vmem>>, %arg2: memref<36x512xbf16, #tpu.memory_space<vmem>>, %arg3: memref<8x512xf32, #tpu.memory_space<vmem>>) attributes {dimension_semantics = [#tpu.dimension_semantics<arbitrary>], iteration_bounds = array<i64: 1>, scalar_prefetch = 0 : i64, scratch_operands = 0 : i64, tpu.core_type = #tpu.core_type<tc>, window_params = [{pipeline_mode = #tpu.pipeline_mode<synchronous>, transform_indices = @transform_0, window_bounds = array<i64: 8, 36>}, {pipeline_mode = #tpu.pipeline_mode<synchronous>, transform_indices = @transform_1, window_bounds = array<i64: 36, 512>}, {pipeline_mode = #tpu.pipeline_mode<synchronous>, transform_indices = @transform_2, window_bounds = array<i64: 8, 512>}]} {
    %c0 = arith.constant 0 : index
    %c0_0 = arith.constant 0 : index
    %0 = vector.load %arg1[%c0, %c0_0] : memref<8x36xbf16, #tpu.memory_space<vmem>>, vector<8x36xbf16>
    %c0_1 = arith.constant 0 : index
    %c0_2 = arith.constant 0 : index
    %1 = vector.load %arg2[%c0_1, %c0_2] : memref<36x512xbf16, #tpu.memory_space<vmem>>, vector<36x512xbf16>
    %cst = arith.constant dense<0.000000e+00> : vector<8x512xf32>
    %2 = tpu.matmul %0, %1, %cst {dimension_numbers = #tpu.dot_dimension_numbers<[1], [0], [0], [1], [0, 0, 1, 1], [], []>} : vector<8x36xbf16>, vector<36x512xbf16>, vector<8x512xf32> -> vector<8x512xf32>
    %c0_3 = arith.constant 0 : index
    %c0_4 = arith.constant 0 : index
    %3 = vector.load %arg3[%c0_3, %c0_4] : memref<8x512xf32, #tpu.memory_space<vmem>>, vector<8x512xf32>
    tpu.vector_store %arg3[%c0_3, %c0_4], %2 {strides = array<i32>} : memref<8x512xf32, #tpu.memory_space<vmem>>, vector<8x512xf32>,
    return
  }
  func.func @transform_0(%arg0: i32) -> (i32, i32) {
    %c0_i32 = arith.constant 0 : i32
    %c0_i32_0 = arith.constant 0 : i32
    %c0_i32_1 = arith.constant 0 : i32
    return %c0_i32, %c0_i32_0 : i32, i32
  }
  func.func @transform_1(%arg0: i32) -> (i32, i32) {
    %c0_i32 = arith.constant 0 : i32
    %c0_i32_0 = arith.constant 0 : i32
    %c0_i32_1 = arith.constant 0 : i32
    return %c0_i32, %c0_i32_0 : i32, i32
  }
  func.func @transform_2(%arg0: i32) -> (i32, i32) {
    %c0_i32 = arith.constant 0 : i32
    %c0_i32_0 = arith.constant 0 : i32
    %c0_i32_1 = arith.constant 0 : i32
    return %c0_i32, %c0_i32_0 : i32, i32
  }
}

</mosaic_0001>

<llo_original>
// kernel: tpu_custom_call.1
$region0: #{tpu_custom_call.1}
  #allocation0 [shape = 'u32[]', space=smem, size = 0x4, offset = 0x4, fixed_abs, tag = 'smem constant byte address 0x4 - core index']
  #allocation1 [shape = 'u32[144,128]{1,0:T(1,128)}', space=vmem, size = 0x12000, scoped, tag = 'internal scratch']
  %s0 = inlined_call_operand.hbm [shape: bf16[8,36], index: 0, kind: input, shape index: {}]
  %s1 = inlined_call_operand.hbm [shape: bf16[36,512], index: 1, kind: input, shape index: {}]
  %s2 = inlined_call_operand.hbm [shape: f32[8,512], index: 2, kind: output, shape index: {}]
  %s3 = sld [smem:[#allocation0]]
  $region26: #{tpu_custom_call.1} parent=0
    _
  %s5 = ssub.s32 1, %s3
  %s6 = scalar_select 0, %s5, %s3
  $region1: #{tpu_custom_call.1} parent=0
    #allocation2 [shape = 'u8[2048]{0}', space=vmem, size = 0x800, scoped, tag = 'input window, operand 0, single buffered']
    #allocation3 [shape = 's32[1]{0}', space=sflag, size = 0x4, scoped, tag = 'scoped memory for tpu_custom_call.1']
    #allocation4 [shape = 's32[1]{0}', space=sflag, size = 0x4, scoped, tag = 'scoped memory for tpu_custom_call.1']
    #allocation5 [shape = 'u8[40960]{0}', space=vmem, size = 0xa000, scoped, tag = 'input window, operand 1, single buffered']
    #allocation6 [shape = 's32[1]{0}', space=sflag, size = 0x4, scoped, tag = 'scoped memory for tpu_custom_call.1']
    #allocation7 [shape = 'u8[16384]{0}', space=vmem, size = 0x4000, scoped, tag = 'output window, operand 0, single buffered']
    %7 = vsyncpa [#allocation3], 0
    %8 = vsyncpa [#allocation6], 0
    %9 = vsyncpa [#allocation4], 0
    // Predicated region
    $region2: #{tpu_custom_call.1} parent=1 // pred_check
      _
    $region3: #{tpu_custom_call.1} parent=1 // pred_check_branch
      %11 = sbr.rel (0) target = $region5
    $region4: #{tpu_custom_call.1} parent=1 // pred_region
      %s13 = ssub.s32 64, 64
      %14 = vsyncadd [#allocation3], %s13
      %s16 = sshll.u32 [#allocation2], 4
      %s17 = int_to_ptr.vmem [resolvable:$true] %s16
      %19 = dma.hbm_to_vmem [thread:$0]  %s0, 64, %s17, [#allocation3]
    $region5: #{tpu_custom_call.1} parent=1 // pred_fallthru
      _
    // Predicated region
    $region6: #{tpu_custom_call.1} parent=1 // pred_check
      _
    $region7: #{tpu_custom_call.1} parent=1 // pred_check_branch
      %21 = sbr.rel (0) target = $region9
    $region8: #{tpu_custom_call.1} parent=1 // pred_region
      %s23 = ssub.s32 1280, 1280
      %24 = vsyncadd [#allocation6], %s23
      %s25 = sshll.u32 [#allocation5], 4
      %s26 = int_to_ptr.vmem [resolvable:$true] %s25
      %31 = dma.hbm_to_vmem [thread:$0]  %s1, 1280, %s26, [#allocation6], 256, 256, 16
    $region9: #{tpu_custom_call.1} parent=1 // pred_fallthru
      _
    // Predicated region
    $region10: #{tpu_custom_call.1} parent=1 // pred_check
      _
    $region11: #{tpu_custom_call.1} parent=1 // pred_check_branch
      %33 = sbr.rel (0) target = $region13
    $region12: #{tpu_custom_call.1} parent=1 // pred_region
      %34 = dma.done [#allocation3], 64
    $region13: #{tpu_custom_call.1} parent=1 // pred_fallthru
      _
    // Predicated region
    $region14: #{tpu_custom_call.1} parent=1 // pred_check
      _
    $region15: #{tpu_custom_call.1} parent=1 // pred_check_branch
      %36 = sbr.rel (0) target = $region17
    $region16: #{tpu_custom_call.1} parent=1 // pred_region
      %37 = dma.done [#allocation6], 1280
    $region17: #{tpu_custom_call.1} parent=1 // pred_fallthru
      _
    %v39 = vld [vmem:[#allocation2] sm:$0xf]
    %v40 = vld [vmem:[#allocation5] sm:$0xff]
    %v41 = vld [vmem:[#allocation5 + $0x8] sm:$0xff]
    %v42 = vld [vmem:[#allocation5 + $0x10] sm:$0xff]
    %v43 = vld [vmem:[#allocation5 + $0x18] sm:$0xff]
    %v44 = vld [vmem:[#allocation5 + $0x20] sm:$0xff]
    %v45 = vld [vmem:[#allocation5 + $0x28] sm:$0xff]
    %v46 = vld [vmem:[#allocation5 + $0x30] sm:$0xff]
    %v47 = vld [vmem:[#allocation5 + $0x38] sm:$0xff]
    %v48 = vld [vmem:[#allocation5 + $0x40] sm:$0x33]
    %v49 = vld [vmem:[#allocation5 + $0x48] sm:$0x33]
    %v60 = vunpack.c.l.b16 %v40
    %v61 = vunpack.c.h.b16 %v40
    %v62 = vunpack.c.l.b16 %v41
    %v63 = vunpack.c.h.b16 %v41
    %v64 = vunpack.c.l.b16 %v42
    %v65 = vunpack.c.h.b16 %v42
    %v66 = vunpack.c.l.b16 %v43
    %v67 = vunpack.c.h.b16 %v43
    %v68 = vunpack.c.l.b16 %v44
    %v69 = vunpack.c.h.b16 %v44
    %v70 = vunpack.c.l.b16 %v45
    %v71 = vunpack.c.h.b16 %v45
    %v72 = vunpack.c.l.b16 %v46
    %v73 = vunpack.c.h.b16 %v46
    %v74 = vunpack.c.l.b16 %v47
    %v75 = vunpack.c.h.b16 %v47
    %v76 = vunpack.c.l.b16 %v48
    %v77 = vunpack.c.h.b16 %v48
    %v78 = vunpack.c.l.b16 %v49
    %v79 = vunpack.c.h.b16 %v49
    %v80 = vpack.c.b16 %v64, %v60
    %v81 = vpack.c.b16 %v65, %v61
    %v82 = vpack.c.b16 %v66, %v62
    %v83 = vpack.c.b16 %v67, %v63
    %v84 = vpack.c.b16 %v72, %v68
    %v85 = vpack.c.b16 %v73, %v69
    %v86 = vpack.c.b16 %v74, %v70
    %v87 = vpack.c.b16 %v75, %v71
    %v88 = vpack.c.b16 %v76, %v76
    %v89 = vpack.c.b16 %v77, %v77
    %v90 = vpack.c.b16 %v78, %v78
    %v91 = vpack.c.b16 %v79, %v79
    %vm100 = vcmask 293888
    %v102 = vsel %vm100, %v39, 0
    %vm104 = vcmask 1041408
    %v106 = vsel %vm104, %v88, 0
    %v109 = vsel %vm104, %v89, 0
    %v112 = vsel %vm104, %v90, 0
    %v115 = vsel %vm104, %v91, 0
    %117 = vmatprep.subr.bf16.mxu0 0
    %118 = vmatpush1.bf16.msra.mxu0 0
    %119 = vmatprep.subr.bf16.mxu0 0
    %120 = vmatpush1.bf16.msra.mxu0 0
    %121 = vmatprep.subr.bf16.mxu0 0
    %122 = vmatpush1.bf16.msra.mxu0 0
    %123 = vmatprep.subr.bf16.mxu0 0
    %124 = vmatpush1.bf16.msra.mxu0 0
    %125 = vmatprep.subr.bf16.mxu0 0
    %126 = vmatpush1.bf16.msra.mxu0 0
    %127 = vmatprep.subr.bf16.mxu0 %v109
    %128 = vmatpush1.bf16.msra.mxu0 %v106
    %129 = vmatprep.subr.bf16.mxu0 %v85
    %130 = vmatpush1.bf16.msra.mxu0 %v84
    %131 = vmatprep.subr.bf16.mxu0 %v81
    %132 = vmatpush1.bf16.msra.mxu0 %v80
    %133 = vmatprep.subr.bf16.mxu0 0
    %134 = vmatpush2.bf16.msra.mxu0 0
    %135 = vmatprep.subr.bf16.mxu0 0
    %136 = vmatpush2.bf16.msra.mxu0 0
    %137 = vmatprep.subr.bf16.mxu0 0
    %138 = vmatpush2.bf16.msra.mxu0 0
    %139 = vmatprep.subr.bf16.mxu0 0
    %140 = vmatpush2.bf16.msra.mxu0 0
    %141 = vmatprep.subr.bf16.mxu0 0
    %142 = vmatpush2.bf16.msra.mxu0 0
    %143 = vmatprep.subr.bf16.mxu0 0
    %144 = vmatpush2.bf16.msra.mxu0 0
    %145 = vmatprep.subr.bf16.mxu0 0
    %146 = vmatpush2.bf16.msra.mxu0 0
    %147 = vmatprep.subr.bf16.mxu0 0
    %148 = vmatpush2.bf16.msra.mxu0 0
    %149 = vmatprep.mubr.bf16.mxu0 0
    %150 = vmatmul.mubr.bf16.gmra.mxu0 %v102
    %v151 = vpop.f32.mrf.mxu0
    %v152 = vadd.f32 0.0, %v151
    %v153 = vpop.f32.mrf.mxu0
    %v154 = vadd.f32 0.0, %v153
    %v155 = vpop.f32.mrf.mxu0
    %v156 = vpop.f32.mrf.mxu0
    %157 = vdwg.mxu0
    %158 = vmatprep.subr.bf16.mxu0 0
    %159 = vmatpush1.bf16.msra.mxu0 0
    %160 = vmatprep.subr.bf16.mxu0 0
    %161 = vmatpush1.bf16.msra.mxu0 0
    %162 = vmatprep.subr.bf16.mxu0 0
    %163 = vmatpush1.bf16.msra.mxu0 0
    %164 = vmatprep.subr.bf16.mxu0 0
    %165 = vmatpush1.bf16.msra.mxu0 0
    %166 = vmatprep.subr.bf16.mxu0 0
    %167 = vmatpush1.bf16.msra.mxu0 0
    %168 = vmatprep.subr.bf16.mxu0 %v115
    %169 = vmatpush1.bf16.msra.mxu0 %v112
    %170 = vmatprep.subr.bf16.mxu0 %v87
    %171 = vmatpush1.bf16.msra.mxu0 %v86
    %172 = vmatprep.subr.bf16.mxu0 %v83
    %173 = vmatpush1.bf16.msra.mxu0 %v82
    %174 = vmatprep.subr.bf16.mxu0 0
    %175 = vmatpush2.bf16.msra.mxu0 0
    %176 = vmatprep.subr.bf16.mxu0 0
    %177 = vmatpush2.bf16.msra.mxu0 0
    %178 = vmatprep.subr.bf16.mxu0 0
    %179 = vmatpush2.bf16.msra.mxu0 0
    %180 = vmatprep.subr.bf16.mxu0 0
    %181 = vmatpush2.bf16.msra.mxu0 0
    %182 = vmatprep.subr.bf16.mxu0 0
    %183 = vmatpush2.bf16.msra.mxu0 0
    %184 = vmatprep.subr.bf16.mxu0 0
    %185 = vmatpush2.bf16.msra.mxu0 0
    %186 = vmatprep.subr.bf16.mxu0 0
    %187 = vmatpush2.bf16.msra.mxu0 0
    %188 = vmatprep.subr.bf16.mxu0 0
    %189 = vmatpush2.bf16.msra.mxu0 0
    %190 = vmatprep.mubr.bf16.mxu0 0
    %191 = vmatmul.mubr.bf16.gmra.mxu0 %v102
    %v192 = vpop.f32.mrf.mxu0
    %v193 = vadd.f32 0.0, %v192
    %v194 = vpop.f32.mrf.mxu0
    %v195 = vadd.f32 0.0, %v194
    %v196 = vpop.f32.mrf.mxu0
    %v197 = vpop.f32.mrf.mxu0
    %198 = vdwg.mxu0
    %199 = vst [vmem:[#allocation7] sm:$0xff] %v152
    %200 = vst [vmem:[#allocation7 + $0x8] sm:$0xff] %v154
    %201 = vst [vmem:[#allocation7 + $0x10] sm:$0xff] %v193
    %202 = vst [vmem:[#allocation7 + $0x18] sm:$0xff] %v195
    // Predicated region
    $region18: #{tpu_custom_call.1} parent=1 // pred_check
      _
    $region19: #{tpu_custom_call.1} parent=1 // pred_check_branch
      %204 = sbr.rel (0) target = $region21
    $region20: #{tpu_custom_call.1} parent=1 // pred_region
      %s206 = ssub.s32 512, 512
      %207 = vsyncadd [#allocation4], %s206
      %s209 = sshll.u32 [#allocation7], 4
      %s210 = int_to_ptr.vmem [resolvable:$true] %s209
      %212 = dma.vmem_to_hbm [thread:$0]  %s210, 512, %s2, [#allocation4]
    $region21: #{tpu_custom_call.1} parent=1 // pred_fallthru
      _
    // Predicated region
    $region22: #{tpu_custom_call.1} parent=1 // pred_check
      _
    $region23: #{tpu_custom_call.1} parent=1 // pred_check_branch
      %214 = sbr.rel (0) target = $region25
    $region24: #{tpu_custom_call.1} parent=1 // pred_region
      %215 = dma.done [#allocation4], 512
    $region25: #{tpu_custom_call.1} parent=1 // pred_fallthru
      _
    %216 = vsyncpa [#allocation3], 1
    %217 = vsyncpa [#allocation6], 1
    %218 = vsyncpa [#allocation4], 1

</llo_original>
